<compile_context>
chip_gen: v7x
topology: tpu7x:2x2x1
jax: 0.10.0
libtpu: 0.0.40
codegen_flags: <defaults>
</compile_context>

<pallas_src>
import functools

import numpy as np
import jax
import jax.numpy as jnp
from jax.experimental import pallas as pl
from jax.experimental.pallas import tpu as pltpu


def _sigmoid_bin_fwd_kernel(pred_ref, out_ref, *, bin_count, reg_scale, step,
                            min_v, max_v, use_fw_regression, bin_centers):
    """pred_ref: (L, TILE_M, 128) block in the input dtype; out_ref: (TILE_M, 128)."""
    # Unrolled running-max select over the bin channels 1 .. bin_count.
    # Strict '>' keeps the FIRST maximum on ties (matches torch.max / jnp.argmax).
    run_max = pred_ref[1].astype(jnp.float32)                      # (TM, 128)
    sel = jnp.full_like(run_max, bin_centers[0])
    for k in range(1, bin_count):
        row = pred_ref[k + 1].astype(jnp.float32)
        take = row > run_max
        sel = jnp.where(take, jnp.float32(bin_centers[k]), sel)
        run_max = jnp.maximum(run_max, row)

    if use_fw_regression:
        x0 = pred_ref[0].astype(jnp.float32)                       # (TM, 128)
        pred_reg = (x0 * reg_scale - reg_scale / 2.0) * step
        result = pred_reg + sel
    else:
        result = sel
    out_ref[...] = jnp.clip(result, min_v, max_v).astype(out_ref.dtype)


class SigmoidBinPallas:
    """JAX/Pallas port of SigmoidBin (forward pass only)."""

    def __init__(self, bin_count=10, min=0.0, max=1.0, reg_scale=2.0,
                 use_fw_regression=True, tile_m=128):
        assert tile_m % 8 == 0, "tile_m must be a multiple of 8 (sublane width)"
        self.bin_count = bin_count
        self.length = bin_count + 1
        self.min = float(min)
        self.max = float(max)
        self.scale = float(max - min)
        self.reg_scale = float(reg_scale)
        self.step = self.scale / bin_count
        self.use_fw_regression = use_fw_regression
        self.tile_m = tile_m
        # Bin centers (match torch.range(start, end + 1e-4, step)); computed
        # once in float32 and baked into the kernel as scalar immediates.
        start = np.float32(self.min + self.scale / 2.0 / bin_count)
        bins_np = (start + np.float32(self.step)
                   * np.arange(bin_count, dtype=np.float32)).astype(np.float32)
        self.bin_centers = tuple(float(v) for v in bins_np)
        self.bins = jnp.asarray(bins_np)   # only used by the pure-JAX reference

    def __call__(self, pred):
        assert pred.shape[-1] == self.length, (
            f'pred.shape[-1]={pred.shape[-1]} is not equal to self.length={self.length}')
        lead_shape = pred.shape[:-1]
        L = self.length
        N = int(np.prod(lead_shape)) if lead_shape else 1

        pred2 = pred.reshape(N, L)                 # collapse leading dims (no copy)
        n_pad = (-N) % 128
        if n_pad:
            # Ragged tail only: pad the item axis up to the 128-lane width.
            # (Grid-level remainders beyond that are handled by Pallas block
            #  masking, so no tile-sized padding is ever done.)
            pred2 = jnp.pad(pred2, ((0, n_pad), (0, 0)))
        n_total = N + n_pad
        M = n_total // 128

        # Single layout pass: items onto (sublane=M, lane=128); channels leading.
        pred_t = pred2.T.reshape(L, M, 128)

        tile_m = M if M < self.tile_m else self.tile_m
        grid = (pl.cdiv(M, tile_m),)

        kernel = functools.partial(
            _sigmoid_bin_fwd_kernel,
            bin_count=self.bin_count,
            reg_scale=self.reg_scale,
            step=self.step,
            min_v=self.min,
            max_v=self.max,
            use_fw_regression=self.use_fw_regression,
            bin_centers=self.bin_centers,
        )

        out = pl.pallas_call(
            kernel,
            out_shape=jax.ShapeDtypeStruct((M, 128), pred.dtype),
            grid_spec=pltpu.PrefetchScalarGridSpec(
                num_scalar_prefetch=0,
                grid=grid,
                in_specs=[pl.BlockSpec((L, tile_m, 128), lambda i: (0, i, 0))],
                out_specs=pl.BlockSpec((tile_m, 128), lambda i: (i, 0)),
            ),
            compiler_params=pltpu.CompilerParams(
                dimension_semantics=("parallel",)),
        )(pred_t)

        return out.reshape(n_total)[:N].reshape(lead_shape)


def _reference_forward(module: SigmoidBinPallas, pred):
    pred_reg = (pred[..., 0] * module.reg_scale - module.reg_scale / 2.0) * module.step
    pred_bin = pred[..., 1:1 + module.bin_count]
    bin_idx = jnp.argmax(pred_bin, axis=-1)
    bin_bias = module.bins[bin_idx]
    result = pred_reg + bin_bias if module.use_fw_regression else bin_bias
    return jnp.clip(result, module.min, module.max)


# TODO(synk): training_loss (BCEWithLogitsLoss + MSELoss path) is not ported; only forward().

if __name__ == "__main__":
    key = jax.random.PRNGKey(0)
    m = SigmoidBinPallas(bin_count=10, min=0.0, max=1.0, reg_scale=2.0)
    # pred last dim must equal length = bin_count + 1 = 11
    pred = jax.random.normal(key, (2, 8, 16, m.length), dtype=jnp.float32)

    out = m(pred)
    out = jax.block_until_ready(out)

    ref = _reference_forward(m, pred)
    np.testing.assert_allclose(np.asarray(out), np.asarray(ref), rtol=1e-6, atol=1e-6)
    assert out.shape == pred.shape[:-1]
    print("KERNEL_OK")
</pallas_src>

<mosaic_0001>
module attributes {stable_mosaic.version = 11 : i64} {
  func.func @_sigmoid_bin_fwd_kernel(%arg0: i32, %arg1: memref<11x2x128xf32, #tpu.memory_space<vmem>>, %arg2: memref<2x128xf32, #tpu.memory_space<vmem>>) attributes {dimension_semantics = [#tpu.dimension_semantics<parallel>], iteration_bounds = array<i64: 1>, scalar_prefetch = 0 : i64, scratch_operands = 0 : i64, tpu.core_type = #tpu.core_type<tc>, window_params = [{transform_indices = @transform_0, window_bounds = array<i64: 11, 2, 128>}, {transform_indices = @transform_1, window_bounds = array<i64: 2, 128>}]} {
    %c1 = arith.constant 1 : index
    %c0 = arith.constant 0 : index
    %c0_0 = arith.constant 0 : index
    %0 = vector.load %arg1[%c1, %c0, %c0_0] : memref<11x2x128xf32, #tpu.memory_space<vmem>>, vector<1x2x128xf32>
    %1 = vector.shape_cast %0 : vector<1x2x128xf32> to vector<2x128xf32>
    %cst = arith.constant 5.000000e-02 : f32
    %2 = vector.broadcast %cst : f32 to vector<2x128xf32>
    %c2 = arith.constant 2 : index
    %c0_1 = arith.constant 0 : index
    %c0_2 = arith.constant 0 : index
    %3 = vector.load %arg1[%c2, %c0_1, %c0_2] : memref<11x2x128xf32, #tpu.memory_space<vmem>>, vector<1x2x128xf32>
    %4 = vector.shape_cast %3 : vector<1x2x128xf32> to vector<2x128xf32>
    %5 = arith.cmpf ogt, %4, %1 : vector<2x128xf32>
    %cst_3 = arith.constant 1.500000e-01 : f32
    %6 = vector.broadcast %cst_3 : f32 to vector<2x128xf32>
    %7 = arith.select %5, %6, %2 : vector<2x128xi1>, vector<2x128xf32>
    %8 = arith.maximumf %1, %4 : vector<2x128xf32>
    %c3 = arith.constant 3 : index
    %c0_4 = arith.constant 0 : index
    %c0_5 = arith.constant 0 : index
    %9 = vector.load %arg1[%c3, %c0_4, %c0_5] : memref<11x2x128xf32, #tpu.memory_space<vmem>>, vector<1x2x128xf32>
    %10 = vector.shape_cast %9 : vector<1x2x128xf32> to vector<2x128xf32>
    %11 = arith.cmpf ogt, %10, %8 : vector<2x128xf32>
    %cst_6 = arith.constant 2.500000e-01 : f32
    %12 = vector.broadcast %cst_6 : f32 to vector<2x128xf32>
    %13 = arith.select %11, %12, %7 : vector<2x128xi1>, vector<2x128xf32>
    %14 = arith.maximumf %8, %10 : vector<2x128xf32>
    %c4 = arith.constant 4 : index
    %c0_7 = arith.constant 0 : index
    %c0_8 = arith.constant 0 : index
    %15 = vector.load %arg1[%c4, %c0_7, %c0_8] : memref<11x2x128xf32, #tpu.memory_space<vmem>>, vector<1x2x128xf32>
    %16 = vector.shape_cast %15 : vector<1x2x128xf32> to vector<2x128xf32>
    %17 = arith.cmpf ogt, %16, %14 : vector<2x128xf32>
    %cst_9 = arith.constant 0.350000024 : f32
    %18 = vector.broadcast %cst_9 : f32 to vector<2x128xf32>
    %19 = arith.select %17, %18, %13 : vector<2x128xi1>, vector<2x128xf32>
    %20 = arith.maximumf %14, %16 : vector<2x128xf32>
    %c5 = arith.constant 5 : index
    %c0_10 = arith.constant 0 : index
    %c0_11 = arith.constant 0 : index
    %21 = vector.load %arg1[%c5, %c0_10, %c0_11] : memref<11x2x128xf32, #tpu.memory_space<vmem>>, vector<1x2x128xf32>
    %22 = vector.shape_cast %21 : vector<1x2x128xf32> to vector<2x128xf32>
    %23 = arith.cmpf ogt, %22, %20 : vector<2x128xf32>
    %cst_12 = arith.constant 0.450000018 : f32
    %24 = vector.broadcast %cst_12 : f32 to vector<2x128xf32>
    %25 = arith.select %23, %24, %19 : vector<2x128xi1>, vector<2x128xf32>
    %26 = arith.maximumf %20, %22 : vector<2x128xf32>
    %c6 = arith.constant 6 : index
    %c0_13 = arith.constant 0 : index
    %c0_14 = arith.constant 0 : index
    %27 = vector.load %arg1[%c6, %c0_13, %c0_14] : memref<11x2x128xf32, #tpu.memory_space<vmem>>, vector<1x2x128xf32>
    %28 = vector.shape_cast %27 : vector<1x2x128xf32> to vector<2x128xf32>
    %29 = arith.cmpf ogt, %28, %26 : vector<2x128xf32>
    %cst_15 = arith.constant 5.500000e-01 : f32
    %30 = vector.broadcast %cst_15 : f32 to vector<2x128xf32>
    %31 = arith.select %29, %30, %25 : vector<2x128xi1>, vector<2x128xf32>
    %32 = arith.maximumf %26, %28 : vector<2x128xf32>
    %c7 = arith.constant 7 : index
    %c0_16 = arith.constant 0 : index
    %c0_17 = arith.constant 0 : index
    %33 = vector.load %arg1[%c7, %c0_16, %c0_17] : memref<11x2x128xf32, #tpu.memory_space<vmem>>, vector<1x2x128xf32>
    %34 = vector.shape_cast %33 : vector<1x2x128xf32> to vector<2x128xf32>
    %35 = arith.cmpf ogt, %34, %32 : vector<2x128xf32>
    %cst_18 = arith.constant 0.650000035 : f32
    %36 = vector.broadcast %cst_18 : f32 to vector<2x128xf32>
    %37 = arith.select %35, %36, %31 : vector<2x128xi1>, vector<2x128xf32>
    %38 = arith.maximumf %32, %34 : vector<2x128xf32>
    %c8 = arith.constant 8 : index
    %c0_19 = arith.constant 0 : index
    %c0_20 = arith.constant 0 : index
    %39 = vector.load %arg1[%c8, %c0_19, %c0_20] : memref<11x2x128xf32, #tpu.memory_space<vmem>>, vector<1x2x128xf32>
    %40 = vector.shape_cast %39 : vector<1x2x128xf32> to vector<2x128xf32>
    %41 = arith.cmpf ogt, %40, %38 : vector<2x128xf32>
    %cst_21 = arith.constant 7.500000e-01 : f32
    %42 = vector.broadcast %cst_21 : f32 to vector<2x128xf32>
    %43 = arith.select %41, %42, %37 : vector<2x128xi1>, vector<2x128xf32>
    %44 = arith.maximumf %38, %40 : vector<2x128xf32>
    %c9 = arith.constant 9 : index
    %c0_22 = arith.constant 0 : index
    %c0_23 = arith.constant 0 : index
    %45 = vector.load %arg1[%c9, %c0_22, %c0_23] : memref<11x2x128xf32, #tpu.memory_space<vmem>>, vector<1x2x128xf32>
    %46 = vector.shape_cast %45 : vector<1x2x128xf32> to vector<2x128xf32>
    %47 = arith.cmpf ogt, %46, %44 : vector<2x128xf32>
    %cst_24 = arith.constant 8.500000e-01 : f32
    %48 = vector.broadcast %cst_24 : f32 to vector<2x128xf32>
    %49 = arith.select %47, %48, %43 : vector<2x128xi1>, vector<2x128xf32>
    %50 = arith.maximumf %44, %46 : vector<2x128xf32>
    %c10 = arith.constant 10 : index
    %c0_25 = arith.constant 0 : index
    %c0_26 = arith.constant 0 : index
    %51 = vector.load %arg1[%c10, %c0_25, %c0_26] : memref<11x2x128xf32, #tpu.memory_space<vmem>>, vector<1x2x128xf32>
    %52 = vector.shape_cast %51 : vector<1x2x128xf32> to vector<2x128xf32>
    %53 = arith.cmpf ogt, %52, %50 : vector<2x128xf32>
    %cst_27 = arith.constant 0.950000047 : f32
    %54 = vector.broadcast %cst_27 : f32 to vector<2x128xf32>
    %55 = arith.select %53, %54, %49 : vector<2x128xi1>, vector<2x128xf32>
    %c0_28 = arith.constant 0 : index
    %c0_29 = arith.constant 0 : index
    %c0_30 = arith.constant 0 : index
    %56 = vector.load %arg1[%c0_28, %c0_29, %c0_30] : memref<11x2x128xf32, #tpu.memory_space<vmem>>, vector<1x2x128xf32>
    %57 = vector.shape_cast %56 : vector<1x2x128xf32> to vector<2x128xf32>
    %cst_31 = arith.constant 2.000000e+00 : f32
    %58 = vector.broadcast %cst_31 : f32 to vector<2x128xf32>
    %59 = arith.mulf %57, %58 : vector<2x128xf32>
    %cst_32 = arith.constant 1.000000e+00 : f32
    %60 = vector.broadcast %cst_32 : f32 to vector<2x128xf32>
    %61 = arith.subf %59, %60 : vector<2x128xf32>
    %cst_33 = arith.constant 1.000000e-01 : f32
    %62 = vector.broadcast %cst_33 : f32 to vector<2x128xf32>
    %63 = arith.mulf %61, %62 : vector<2x128xf32>
    %64 = arith.addf %63, %55 : vector<2x128xf32>
    %cst_34 = arith.constant 0.000000e+00 : f32
    %cst_35 = arith.constant 1.000000e+00 : f32
    %65 = vector.broadcast %cst_34 : f32 to vector<2x128xf32>
    %66 = arith.maximumf %65, %64 : vector<2x128xf32>
    %67 = vector.broadcast %cst_35 : f32 to vector<2x128xf32>
    %68 = arith.minimumf %67, %66 : vector<2x128xf32>
    %c0_36 = arith.constant 0 : index
    %c0_37 = arith.constant 0 : index
    %69 = vector.load %arg2[%c0_36, %c0_37] : memref<2x128xf32, #tpu.memory_space<vmem>>, vector<2x128xf32>
    tpu.vector_store %arg2[%c0_36, %c0_37], %68 {strides = array<i32>} : memref<2x128xf32, #tpu.memory_space<vmem>>, vector<2x128xf32>,
    return
  }
  func.func @transform_0(%arg0: i32) -> (i32, i32, i32) {
    %c0_i32 = arith.constant 0 : i32
    %c0_i32_0 = arith.constant 0 : i32
    %c0_i32_1 = arith.constant 0 : i32
    return %c0_i32, %arg0, %c0_i32_0 : i32, i32, i32
  }
  func.func @transform_1(%arg0: i32) -> (i32, i32) {
    %c0_i32 = arith.constant 0 : i32
    %c0_i32_0 = arith.constant 0 : i32
    return %arg0, %c0_i32 : i32, i32
  }
}

</mosaic_0001>

<llo_original>
// kernel: tpu_custom_call.1
$region0: #{tpu_custom_call.1}
  #allocation0 [shape = 'u32[]', space=smem, size = 0x4, offset = 0x4, fixed_abs, tag = 'smem constant byte address 0x4 - core index']
  #allocation1 [shape = 'u32[144,128]{1,0:T(1,128)}', space=vmem, size = 0x12000, scoped, tag = 'internal scratch']
  %s0 = inlined_call_operand.hbm [shape: f32[11,2,128], index: 0, kind: input, shape index: {}]
  %s1 = inlined_call_operand.hbm [shape: f32[2,128], index: 1, kind: output, shape index: {}]
  %s2 = sld [smem:[#allocation0]]
  $region18: #{tpu_custom_call.1} parent=0
    _
  %s4 = ssub.s32 1, %s2
  %s5 = scalar_select 0, %s4, %s2
  $region1: #{tpu_custom_call.1} parent=0
    #allocation2 [shape = 'u8[11264]{0}', space=vmem, size = 0x2c00, scoped, tag = 'input window, operand 0, single buffered']
    #allocation3 [shape = 's32[1]{0}', space=sflag, size = 0x4, scoped, tag = 'scoped memory for tpu_custom_call.1']
    #allocation4 [shape = 's32[1]{0}', space=sflag, size = 0x4, scoped, tag = 'scoped memory for tpu_custom_call.1']
    #allocation5 [shape = 'u8[1024]{0}', space=vmem, size = 0x400, scoped, tag = 'output window, operand 0, single buffered']
    %6 = vsyncpa [#allocation3], 0
    %7 = vsyncpa [#allocation4], 0
    // Predicated region
    $region2: #{tpu_custom_call.1} parent=1 // pred_check
      _
    $region3: #{tpu_custom_call.1} parent=1 // pred_check_branch
      %9 = sbr.rel (0) target = $region5
    $region4: #{tpu_custom_call.1} parent=1 // pred_region
      %s11 = ssub.s32 352, 352
      %12 = vsyncadd [#allocation3], %s11
      %s13 = sshll.u32 [#allocation2], 4
      %s14 = int_to_ptr.vmem [resolvable:$true] %s13
      %19 = dma.hbm_to_vmem [thread:$0]  %s0, 352, %s14, [#allocation3], 32, 32, 2
    $region5: #{tpu_custom_call.1} parent=1 // pred_fallthru
      _
    // Predicated region
    $region6: #{tpu_custom_call.1} parent=1 // pred_check
      _
    $region7: #{tpu_custom_call.1} parent=1 // pred_check_branch
      %21 = sbr.rel (0) target = $region9
    $region8: #{tpu_custom_call.1} parent=1 // pred_region
      %22 = dma.done [#allocation3], 352
    $region9: #{tpu_custom_call.1} parent=1 // pred_fallthru
      _
    %s23 = scalar_lea.vmem [#allocation2], 2
    %v24 = vld [vmem:[%s23] sm:$0x3]
    %s25 = scalar_lea.vmem [#allocation2], 4
    %v26 = vld [vmem:[%s25] sm:$0x3]
    %vm27 = vcmp.gt.f32.partialorder %v26, %v24
    %v28 = vsel %vm27, 0.15, 0.05
    %v29 = vmax.f32 %v24, %v26
    %s30 = scalar_lea.vmem [#allocation2], 6
    %v31 = vld [vmem:[%s30] sm:$0x3]
    %vm32 = vcmp.gt.f32.partialorder %v31, %v29
    %v33 = vsel %vm32, 0.25, %v28
    %v34 = vmax.f32 %v29, %v31
    %s35 = scalar_lea.vmem [#allocation2], 8
    %v36 = vld [vmem:[%s35] sm:$0x3]
    %vm37 = vcmp.gt.f32.partialorder %v36, %v34
    %v38 = vsel %vm37, 0.35000002, %v33
    %v39 = vmax.f32 %v34, %v36
    %s40 = scalar_lea.vmem [#allocation2], 10
    %v41 = vld [vmem:[%s40] sm:$0x3]
    %vm42 = vcmp.gt.f32.partialorder %v41, %v39
    %v43 = vsel %vm42, 0.45000002, %v38
    %v44 = vmax.f32 %v39, %v41
    %s45 = scalar_lea.vmem [#allocation2], 12
    %v46 = vld [vmem:[%s45] sm:$0x3]
    %vm47 = vcmp.gt.f32.partialorder %v46, %v44
    %v48 = vsel %vm47, 0.55, %v43
    %v49 = vmax.f32 %v44, %v46
    %s50 = scalar_lea.vmem [#allocation2], 14
    %v51 = vld [vmem:[%s50] sm:$0x3]
    %vm52 = vcmp.gt.f32.partialorder %v51, %v49
    %v53 = vsel %vm52, 0.65000004, %v48
    %v54 = vmax.f32 %v49, %v51
    %s55 = scalar_lea.vmem [#allocation2], 16
    %v56 = vld [vmem:[%s55] sm:$0x3]
    %vm57 = vcmp.gt.f32.partialorder %v56, %v54
    %v58 = vsel %vm57, 0.75, %v53
    %v59 = vmax.f32 %v54, %v56
    %s60 = scalar_lea.vmem [#allocation2], 18
    %v61 = vld [vmem:[%s60] sm:$0x3]
    %vm62 = vcmp.gt.f32.partialorder %v61, %v59
    %v63 = vsel %vm62, 0.85, %v58
    %v64 = vmax.f32 %v59, %v61
    %s65 = scalar_lea.vmem [#allocation2], 20
    %v66 = vld [vmem:[%s65] sm:$0x3]
    %vm67 = vcmp.gt.f32.partialorder %v66, %v64
    %v68 = vsel %vm67, 0.95000005, %v63
    %v69 = vld [vmem:[#allocation2] sm:$0x3]
    %v70 = vmul.f32 %v69, 2.0
    %v71 = vsub.f32 %v70, 1.0
    %v72 = vmul.f32 %v71, 0.1
    %v73 = vadd.f32 %v72, %v68
    %v74 = vmax.f32 %v73, 0.0
    %v75 = vmin.f32 %v74, 1.0
    %76 = vst [vmem:[#allocation5] sm:$0x3] %v75
    // Predicated region
    $region10: #{tpu_custom_call.1} parent=1 // pred_check
      _
    $region11: #{tpu_custom_call.1} parent=1 // pred_check_branch
      %78 = sbr.rel (0) target = $region13
    $region12: #{tpu_custom_call.1} parent=1 // pred_region
      %s80 = ssub.s32 32, 32
      %81 = vsyncadd [#allocation4], %s80
      %s83 = sshll.u32 [#allocation5], 4
      %s84 = int_to_ptr.vmem [resolvable:$true] %s83
      %86 = dma.vmem_to_hbm [thread:$0]  %s84, 32, %s1, [#allocation4]
    $region13: #{tpu_custom_call.1} parent=1 // pred_fallthru
      _
    // Predicated region
    $region14: #{tpu_custom_call.1} parent=1 // pred_check
      _
    $region15: #{tpu_custom_call.1} parent=1 // pred_check_branch
      %88 = sbr.rel (0) target = $region17
    $region16: #{tpu_custom_call.1} parent=1 // pred_region
      %89 = dma.done [#allocation4], 32
    $region17: #{tpu_custom_call.1} parent=1 // pred_fallthru
      _
    %90 = vsyncpa [#allocation3], 1
    %91 = vsyncpa [#allocation4], 1

</llo_original>
